<compile_context>
chip_gen: v6e
topology: v6e:2x2x1
jax: 0.10.0
libtpu: 0.0.40
codegen_flags: <defaults>
</compile_context>

<pallas_src>
import functools

import jax
import jax.numpy as jnp
from jax.experimental import pallas as pl
from jax.experimental.pallas import tpu as pltpu

HIDDEN = 256
LANE = 128
NEG_INF = -1e30  # finite "minus infinity" for padded action lanes


def _round_up(x, m):
    return ((x + m - 1) // m) * m


def policy_kernel(x_ref, w1_ref, w2_ref, w3_ref, bias_ref, o_ref, *, a_pad):
    # biases arrive concatenated as (1, HIDDEN + HIDDEN + a_pad), f32
    b1 = bias_ref[:, :HIDDEN]
    b2 = bias_ref[:, HIDDEN:2 * HIDDEN]
    b3 = bias_ref[:, 2 * HIDDEN:2 * HIDDEN + a_pad]

    # fc1 + relu (bf16 operands, f32 accumulate)
    h1 = jnp.dot(x_ref[...], w1_ref[...], preferred_element_type=jnp.float32)
    h1 = jnp.maximum(h1 + b1, 0.0).astype(jnp.bfloat16)

    # fc2 + relu (dropout is identity at inference)
    # TODO(synk): training-mode dropout(p=0.2) would need pltpu.prng_random_bits masking.
    h2 = jnp.dot(h1, w2_ref[...], preferred_element_type=jnp.float32)
    h2 = jnp.maximum(h2 + b2, 0.0).astype(jnp.bfloat16)

    # fc3 + softmax over last axis. Padded action lanes carry bias = NEG_INF,
    # so exp() drives them to exactly 0 probability.
    logits = jnp.dot(h2, w3_ref[...], preferred_element_type=jnp.float32) + b3
    m = jnp.max(logits, axis=-1, keepdims=True)
    e = jnp.exp(logits - m)
    denom = jnp.sum(e, axis=-1, keepdims=True)
    o_ref[...] = (e * pl.reciprocal(denom, approx=True)).astype(o_ref.dtype)


def policy_forward(x, w1, b1, w2, b2, w3, b3, *, block_b=128):
    B, S = x.shape
    A = w3.shape[1]
    A_pad = _round_up(max(A, LANE), LANE)
    B_pad = _round_up(B, block_b)

    # ---- host-side layout prep (padding + dtype cast) ----
    # batch -> multiple of block_b (zero rows; harmless, sliced away)
    x_p = jnp.zeros((B_pad, S), jnp.bfloat16).at[:B, :].set(x.astype(jnp.bfloat16))
    # action dim -> lane-dense 128 multiple
    w3_p = jnp.zeros((HIDDEN, A_pad), jnp.float32).at[:, :A].set(w3)
    b3_p = jnp.full((1, A_pad), NEG_INF, jnp.float32).at[:, :A].set(b3)
    # weights to bf16 (MXU native); biases stay f32, fused into one array
    w1_b = w1.astype(jnp.bfloat16)
    w2_b = w2.astype(jnp.bfloat16)
    w3_b = w3_p.astype(jnp.bfloat16)
    biases = jnp.concatenate([b1, b2, b3_p], axis=-1)  # (1, 2*HIDDEN + A_pad) f32

    grid = (B_pad // block_b,)
    kernel = functools.partial(policy_kernel, a_pad=A_pad)

    out = pl.pallas_call(
        kernel,
        out_shape=jax.ShapeDtypeStruct((B_pad, A_pad), jnp.float32),
        grid_spec=pltpu.PrefetchScalarGridSpec(
            num_scalar_prefetch=0,
            grid=grid,
            in_specs=[
                pl.BlockSpec((block_b, S), lambda i: (i, 0)),         # x tile
                pl.BlockSpec((S, HIDDEN), lambda i: (0, 0)),          # W1 (resident)
                pl.BlockSpec((HIDDEN, HIDDEN), lambda i: (0, 0)),     # W2 (resident)
                pl.BlockSpec((HIDDEN, A_pad), lambda i: (0, 0)),      # W3 (resident)
                pl.BlockSpec((1, 2 * HIDDEN + A_pad), lambda i: (0, 0)),  # biases
            ],
            out_specs=pl.BlockSpec((block_b, A_pad), lambda i: (i, 0)),
        ),
        compiler_params=pltpu.CompilerParams(
            dimension_semantics=("parallel",),  # shard batch tiles across TCs (v7x)
        ),
    )(x_p, w1_b, w2_b, w3_b, biases)

    return out[:B, :A]


def init_params(key, state_size, action_size):
    """Deterministic synthetic init (uniform, fan_in-scaled like PyTorch Linear)."""
    ks = jax.random.split(key, 6)

    def linear(kw, kb, fan_in, fan_out):
        bound = 1.0 / jnp.sqrt(jnp.float32(fan_in))
        w = jax.random.uniform(kw, (fan_in, fan_out), jnp.float32, -bound, bound)
        b = jax.random.uniform(kb, (1, fan_out), jnp.float32, -bound, bound)
        return w, b

    w1, b1 = linear(ks[0], ks[1], state_size, HIDDEN)
    w2, b2 = linear(ks[2], ks[3], HIDDEN, HIDDEN)
    w3, b3 = linear(ks[4], ks[5], HIDDEN, action_size)
    return w1, b1, w2, b2, w3, b3


def reference_forward(x, w1, b1, w2, b2, w3, b3):
    h1 = jnp.maximum(x @ w1 + b1, 0.0)
    h2 = jnp.maximum(h1 @ w2 + b2, 0.0)
    return jax.nn.softmax(h2 @ w3 + b3, axis=-1)


if __name__ == "__main__":
    batch = 8
    state_size = 32
    action_size = 16

    key = jax.random.PRNGKey(0)
    k_x, k_p = jax.random.split(key)
    x = jax.random.normal(k_x, (batch, state_size), jnp.float32)
    params = init_params(k_p, state_size, action_size)

    out = policy_forward(x, *params)
    out = jax.block_until_ready(out)

    assert out.shape == (batch, action_size)

    # sanity: softmax rows sum to ~1 (approx reciprocal -> loosened tolerance)
    row_sums = jnp.sum(out, axis=-1)
    assert bool(jnp.allclose(row_sums, 1.0, atol=5e-3)), row_sums

    # sanity vs. pure-JAX f32 reference (bf16 matmuls -> loose tolerance)
    ref = reference_forward(x, *params)
    assert bool(jnp.allclose(out, ref, atol=2e-2)), jnp.max(jnp.abs(out - ref))

    print("KERNEL_OK")
</pallas_src>

<mosaic_0001>
module attributes {stable_mosaic.version = 11 : i64} {
  func.func @policy_kernel(%arg0: i32, %arg1: memref<128x32xbf16, #tpu.memory_space<vmem>>, %arg2: memref<32x256xbf16, #tpu.memory_space<vmem>>, %arg3: memref<256x256xbf16, #tpu.memory_space<vmem>>, %arg4: memref<256x128xbf16, #tpu.memory_space<vmem>>, %arg5: memref<1x640xf32, #tpu.memory_space<vmem>>, %arg6: memref<128x128xf32, #tpu.memory_space<vmem>>) attributes {dimension_semantics = [#tpu.dimension_semantics<parallel>], iteration_bounds = array<i64: 1>, scalar_prefetch = 0 : i64, scratch_operands = 0 : i64, tpu.core_type = #tpu.core_type<tc>, window_params = [{transform_indices = @transform_0, window_bounds = array<i64: 128, 32>}, {pipeline_mode = #tpu.pipeline_mode<synchronous>, transform_indices = @transform_1, window_bounds = array<i64: 32, 256>}, {pipeline_mode = #tpu.pipeline_mode<synchronous>, transform_indices = @transform_2, window_bounds = array<i64: 256, 256>}, {pipeline_mode = #tpu.pipeline_mode<synchronous>, transform_indices = @transform_3, window_bounds = array<i64: 256, 128>}, {pipeline_mode = #tpu.pipeline_mode<synchronous>, transform_indices = @transform_4, window_bounds = array<i64: 1, 640>}, {transform_indices = @transform_5, window_bounds = array<i64: 128, 128>}]} {
    %c0 = arith.constant 0 : index
    %c0_0 = arith.constant 0 : index
    %0 = vector.load %arg5[%c0, %c0_0] : memref<1x640xf32, #tpu.memory_space<vmem>>, vector<1x256xf32>
    %c0_1 = arith.constant 0 : index
    %c256 = arith.constant 256 : index
    %1 = vector.load %arg5[%c0_1, %c256] : memref<1x640xf32, #tpu.memory_space<vmem>>, vector<1x256xf32>
    %c0_2 = arith.constant 0 : index
    %c512 = arith.constant 512 : index
    %2 = vector.load %arg5[%c0_2, %c512] : memref<1x640xf32, #tpu.memory_space<vmem>>, vector<1x128xf32>
    %c0_3 = arith.constant 0 : index
    %c0_4 = arith.constant 0 : index
    %3 = vector.load %arg1[%c0_3, %c0_4] : memref<128x32xbf16, #tpu.memory_space<vmem>>, vector<128x32xbf16>
    %c0_5 = arith.constant 0 : index
    %c0_6 = arith.constant 0 : index
    %4 = vector.load %arg2[%c0_5, %c0_6] : memref<32x256xbf16, #tpu.memory_space<vmem>>, vector<32x256xbf16>
    %cst = arith.constant dense<0.000000e+00> : vector<128x256xf32>
    %5 = tpu.matmul %3, %4, %cst {dimension_numbers = #tpu.dot_dimension_numbers<[1], [0], [0], [1], [0, 0, 1, 1], [], []>} : vector<128x32xbf16>, vector<32x256xbf16>, vector<128x256xf32> -> vector<128x256xf32>
    %6 = vector.broadcast %0 : vector<1x256xf32> to vector<128x256xf32>
    %7 = arith.addf %5, %6 : vector<128x256xf32>
    %cst_7 = arith.constant 0.000000e+00 : f32
    %8 = vector.broadcast %cst_7 : f32 to vector<128x256xf32>
    %9 = arith.maximumf %7, %8 : vector<128x256xf32>
    %10 = arith.truncf %9 : vector<128x256xf32> to vector<128x256xbf16>
    %c0_8 = arith.constant 0 : index
    %c0_9 = arith.constant 0 : index
    %11 = vector.load %arg3[%c0_8, %c0_9] : memref<256x256xbf16, #tpu.memory_space<vmem>>, vector<256x256xbf16>
    %cst_10 = arith.constant dense<0.000000e+00> : vector<128x256xf32>
    %12 = tpu.matmul %10, %11, %cst_10 {dimension_numbers = #tpu.dot_dimension_numbers<[1], [0], [0], [1], [0, 0, 1, 1], [], []>} : vector<128x256xbf16>, vector<256x256xbf16>, vector<128x256xf32> -> vector<128x256xf32>
    %13 = vector.broadcast %1 : vector<1x256xf32> to vector<128x256xf32>
    %14 = arith.addf %12, %13 : vector<128x256xf32>
    %cst_11 = arith.constant 0.000000e+00 : f32
    %15 = vector.broadcast %cst_11 : f32 to vector<128x256xf32>
    %16 = arith.maximumf %14, %15 : vector<128x256xf32>
    %17 = arith.truncf %16 : vector<128x256xf32> to vector<128x256xbf16>
    %c0_12 = arith.constant 0 : index
    %c0_13 = arith.constant 0 : index
    %18 = vector.load %arg4[%c0_12, %c0_13] : memref<256x128xbf16, #tpu.memory_space<vmem>>, vector<256x128xbf16>
    %cst_14 = arith.constant dense<0.000000e+00> : vector<128x128xf32>
    %19 = tpu.matmul %17, %18, %cst_14 {dimension_numbers = #tpu.dot_dimension_numbers<[1], [0], [0], [1], [0, 0, 1, 1], [], []>} : vector<128x256xbf16>, vector<256x128xbf16>, vector<128x128xf32> -> vector<128x128xf32>
    %20 = vector.broadcast %2 : vector<1x128xf32> to vector<128x128xf32>
    %21 = arith.addf %19, %20 : vector<128x128xf32>
    %cst_15 = arith.constant dense<0xFF800000> : vector<128xf32>
    %22 = vector.multi_reduction <maximumf>, %21, %cst_15 [1] : vector<128x128xf32> to vector<128xf32>
    %23 = vector.shape_cast %22 : vector<128xf32> to vector<128x1xf32>
    %24 = vector.broadcast %23 : vector<128x1xf32> to vector<128x128xf32>
    %25 = arith.subf %21, %24 : vector<128x128xf32>
    %26 = math.exp %25 : vector<128x128xf32>
    %cst_16 = arith.constant dense<0.000000e+00> : vector<128xf32>
    %27 = vector.multi_reduction <add>, %26, %cst_16 [1] : vector<128x128xf32> to vector<128xf32>
    %28 = vector.shape_cast %27 : vector<128xf32> to vector<128x1xf32>
    %29 = tpu.reciprocal %28 {approx = true} : vector<128x1xf32> -> vector<128x1xf32>
    %30 = vector.broadcast %29 : vector<128x1xf32> to vector<128x128xf32>
    %31 = arith.mulf %26, %30 : vector<128x128xf32>
    %c0_17 = arith.constant 0 : index
    %c0_18 = arith.constant 0 : index
    %32 = vector.load %arg6[%c0_17, %c0_18] : memref<128x128xf32, #tpu.memory_space<vmem>>, vector<128x128xf32>
    tpu.vector_store %arg6[%c0_17, %c0_18], %31 {strides = array<i32>} : memref<128x128xf32, #tpu.memory_space<vmem>>, vector<128x128xf32>,
    return
  }
  func.func @transform_0(%arg0: i32) -> (i32, i32) {
    %c0_i32 = arith.constant 0 : i32
    %c0_i32_0 = arith.constant 0 : i32
    return %arg0, %c0_i32 : i32, i32
  }
  func.func @transform_1(%arg0: i32) -> (i32, i32) {
    %c0_i32 = arith.constant 0 : i32
    %c0_i32_0 = arith.constant 0 : i32
    %c0_i32_1 = arith.constant 0 : i32
    return %c0_i32, %c0_i32_0 : i32, i32
  }
  func.func @transform_2(%arg0: i32) -> (i32, i32) {
    %c0_i32 = arith.constant 0 : i32
    %c0_i32_0 = arith.constant 0 : i32
    %c0_i32_1 = arith.constant 0 : i32
    return %c0_i32, %c0_i32_0 : i32, i32
  }
  func.func @transform_3(%arg0: i32) -> (i32, i32) {
    %c0_i32 = arith.constant 0 : i32
    %c0_i32_0 = arith.constant 0 : i32
    %c0_i32_1 = arith.constant 0 : i32
    return %c0_i32, %c0_i32_0 : i32, i32
  }
  func.func @transform_4(%arg0: i32) -> (i32, i32) {
    %c0_i32 = arith.constant 0 : i32
    %c0_i32_0 = arith.constant 0 : i32
    %c0_i32_1 = arith.constant 0 : i32
    return %c0_i32, %c0_i32_0 : i32, i32
  }
  func.func @transform_5(%arg0: i32) -> (i32, i32) {
    %c0_i32 = arith.constant 0 : i32
    %c0_i32_0 = arith.constant 0 : i32
    return %arg0, %c0_i32 : i32, i32
  }
}

</mosaic_0001>

<llo_original>
// kernel: tpu_custom_call.1
$region0: #{tpu_custom_call.1}
  #allocation0 [shape = 'u32[]', space=smem, size = 0x4, offset = 0x4, fixed_abs, tag = 'smem constant byte address 0x4 - core index']
  #allocation1 [shape = 'u32[144,128]{1,0:T(1,128)}', space=vmem, size = 0x12000, scoped, tag = 'internal scratch']
  %s0 = inlined_call_operand.vmem [shape: bf16[128,32], index: 0, kind: input, shape index: {}]
  %s1 = inlined_call_operand.vmem [shape: bf16[32,256], index: 1, kind: input, shape index: {}]
  %s2 = inlined_call_operand.hbm [shape: bf16[256,256], index: 2, kind: input, shape index: {}]
  %s3 = inlined_call_operand.hbm [shape: bf16[256,128], index: 3, kind: input, shape index: {}]
  %s4 = inlined_call_operand.vmem [shape: f32[1,640], index: 4, kind: input, shape index: {}]
  %s5 = inlined_call_operand.hbm [shape: f32[128,128], index: 5, kind: output, shape index: {}]
  %s6 = sld [smem:[#allocation0]]
  $region38: #{tpu_custom_call.1} parent=0
    _
  %s8 = ssub.s32 1, %s6
  %s9 = scalar_select 0, %s8, %s6
  $region1: #{tpu_custom_call.1} parent=0
    #allocation2 [shape = 'u8[131072]{0}', space=vmem, size = 0x20000, scoped, tag = 'input window, operand 2, single buffered']
    #allocation3 [shape = 's32[1]{0}', space=sflag, size = 0x4, scoped, tag = 'scoped memory for tpu_custom_call.1']
    #allocation4 [shape = 's32[1]{0}', space=sflag, size = 0x4, scoped, tag = 'scoped memory for tpu_custom_call.1']
    #allocation5 [shape = 'u8[65536]{0}', space=vmem, size = 0x10000, scoped, tag = 'input window, operand 3, single buffered']
    #allocation6 [shape = 's32[1]{0}', space=sflag, size = 0x4, scoped, tag = 'scoped memory for tpu_custom_call.1']
    #allocation7 [shape = 'u8[65536]{0}', space=vmem, size = 0x10000, scoped, tag = 'output window, operand 0, single buffered']
    %10 = vsyncpa [#allocation3], 0
    %11 = vsyncpa [#allocation6], 0
    %12 = vsyncpa [#allocation4], 0
    // Predicated region
    $region2: #{tpu_custom_call.1} parent=1 // pred_check
      _
    $region3: #{tpu_custom_call.1} parent=1 // pred_check_branch
      %14 = sbr.rel (0) target = $region5
    $region4: #{tpu_custom_call.1} parent=1 // pred_region
      _
    $region5: #{tpu_custom_call.1} parent=1 // pred_fallthru
      _
    // Predicated region
    $region6: #{tpu_custom_call.1} parent=1 // pred_check
      _
    $region7: #{tpu_custom_call.1} parent=1 // pred_check_branch
      %16 = sbr.rel (0) target = $region9
    $region8: #{tpu_custom_call.1} parent=1 // pred_region
      _
    $region9: #{tpu_custom_call.1} parent=1 // pred_fallthru
      _
    // Predicated region
    $region10: #{tpu_custom_call.1} parent=1 // pred_check
      _
    $region11: #{tpu_custom_call.1} parent=1 // pred_check_branch
      %18 = sbr.rel (0) target = $region13
    $region12: #{tpu_custom_call.1} parent=1 // pred_region
      %s20 = ssub.s32 4096, 4096
      %21 = vsyncadd [#allocation3], %s20
      %s22 = sshll.u32 [#allocation2], 4
      %s23 = int_to_ptr.vmem [resolvable:$true] %s22
      %28 = dma.hbm_to_vmem [thread:$0]  %s2, 4096, %s23, [#allocation3], 128, 128, 8
    $region13: #{tpu_custom_call.1} parent=1 // pred_fallthru
      _
    // Predicated region
    $region14: #{tpu_custom_call.1} parent=1 // pred_check
      _
    $region15: #{tpu_custom_call.1} parent=1 // pred_check_branch
      %30 = sbr.rel (0) target = $region17
    $region16: #{tpu_custom_call.1} parent=1 // pred_region
      %s32 = ssub.s32 2048, 2048
      %33 = vsyncadd [#allocation6], %s32
      %s34 = sshll.u32 [#allocation5], 4
      %s35 = int_to_ptr.vmem [resolvable:$true] %s34
      %40 = dma.hbm_to_vmem [thread:$0]  %s3, 2048, %s35, [#allocation6], 64, 64, 4
    $region17: #{tpu_custom_call.1} parent=1 // pred_fallthru
      _
    // Predicated region
    $region18: #{tpu_custom_call.1} parent=1 // pred_check
      _
    $region19: #{tpu_custom_call.1} parent=1 // pred_check_branch
      %42 = sbr.rel (0) target = $region21
    $region20: #{tpu_custom_call.1} parent=1 // pred_region
      _
    $region21: #{tpu_custom_call.1} parent=1 // pred_fallthru
      _
    // Predicated region
    $region22: #{tpu_custom_call.1} parent=1 // pred_check
      _
    $region23: #{tpu_custom_call.1} parent=1 // pred_check_branch
      %44 = sbr.rel (0) target = $region25
    $region24: #{tpu_custom_call.1} parent=1 // pred_region
      %45 = dma.done [#allocation3], 4096
    $region25: #{tpu_custom_call.1} parent=1 // pred_fallthru
      _
    // Predicated region
    $region26: #{tpu_custom_call.1} parent=1 // pred_check
      _
    $region27: #{tpu_custom_call.1} parent=1 // pred_check_branch
      %47 = sbr.rel (0) target = $region29
    $region28: #{tpu_custom_call.1} parent=1 // pred_region
      %48 = dma.done [#allocation6], 2048
    $region29: #{tpu_custom_call.1} parent=1 // pred_fallthru
      _
    %v50 = vld [vmem:[%s4] sm:$0x3]
    %v51 = vld [vmem:[%s4 + $0x2] sm:$0x3]
    %v52 = vld [vmem:[%s4 + $0x4] sm:$0x1]
    %v53 = vld [vmem:[%s0] sm:$0xf]
    %v54 = vld [vmem:[%s0 + $0x4] sm:$0xf]
    %v55 = vld [vmem:[%s0 + $0x8] sm:$0xf]
    %v56 = vld [vmem:[%s0 + $0xc] sm:$0xf]
    %v57 = vld [vmem:[%s0 + $0x10] sm:$0xf]
    %v58 = vld [vmem:[%s0 + $0x14] sm:$0xf]
    %v59 = vld [vmem:[%s0 + $0x18] sm:$0xf]
    %v60 = vld [vmem:[%s0 + $0x1c] sm:$0xf]
    %v61 = vld [vmem:[%s0 + $0x20] sm:$0xf]
    %v62 = vld [vmem:[%s0 + $0x24] sm:$0xf]
    %v63 = vld [vmem:[%s0 + $0x28] sm:$0xf]
    %v64 = vld [vmem:[%s0 + $0x2c] sm:$0xf]
    %v65 = vld [vmem:[%s0 + $0x30] sm:$0xf]
    %v66 = vld [vmem:[%s0 + $0x34] sm:$0xf]
    %v67 = vld [vmem:[%s0 + $0x38] sm:$0xf]
    %v68 = vld [vmem:[%s0 + $0x3c] sm:$0xf]
    %v69 = vld [vmem:[%s1] sm:$0xff]
    %v70 = vld [vmem:[%s1 + $0x8] sm:$0xff]
    %v71 = vld [vmem:[%s1 + $0x10] sm:$0xff]
    %v72 = vld [vmem:[%s1 + $0x18] sm:$0xff]
    %v74 = vlaneseq
    %v75 = vshrl.u32 %v74, 7
    %v76 = vsub.s32 0, %v75
    %v77 = vrot.slane %v50, %v76
    %v78 = vlaneseq
    %v79 = vshrl.u32 %v78, 7
    %v80 = vsub.s32 1, %v79
    %v81 = vrot.slane %v50, %v80
    %v100 = vunpack.c.l.b16 %v53
    %v101 = vunpack.c.l.b16 %v54
    %v102 = vunpack.c.l.b16 %v55
    %v103 = vunpack.c.l.b16 %v56
    %v104 = vunpack.c.l.b16 %v57
    %v105 = vunpack.c.l.b16 %v58
    %v106 = vunpack.c.l.b16 %v59
    %v107 = vunpack.c.l.b16 %v60
    %v108 = vunpack.c.l.b16 %v61
    %v109 = vunpack.c.l.b16 %v62
    %v110 = vunpack.c.l.b16 %v63
    %v111 = vunpack.c.l.b16 %v64
    %v112 = vunpack.c.l.b16 %v65
    %v113 = vunpack.c.l.b16 %v66
    %v114 = vunpack.c.l.b16 %v67
    %v115 = vunpack.c.l.b16 %v68
    %v116 = vpack.c.b16 %v101, %v100
    %v117 = vpack.c.b16 %v103, %v102
    %v118 = vpack.c.b16 %v105, %v104
    %v119 = vpack.c.b16 %v107, %v106
    %v120 = vpack.c.b16 %v109, %v108
    %v121 = vpack.c.b16 %v111, %v110
    %v122 = vpack.c.b16 %v113, %v112
    %v123 = vpack.c.b16 %v115, %v114
    %v128 = vunpack.c.l.b16 %v69
    %v129 = vunpack.c.h.b16 %v69
    %v130 = vunpack.c.l.b16 %v70
    %v131 = vunpack.c.h.b16 %v70
    %v132 = vunpack.c.l.b16 %v71
    %v133 = vunpack.c.h.b16 %v71
    %v134 = vunpack.c.l.b16 %v72
    %v135 = vunpack.c.h.b16 %v72
    %v136 = vpack.c.b16 %v130, %v128
    %v137 = vpack.c.b16 %v131, %v129
    %v138 = vpack.c.b16 %v134, %v132
    %v139 = vpack.c.b16 %v135, %v133
    %vm144 = vcmask 261120
    %v146 = vsel %vm144, %v116, 0
    %v149 = vsel %vm144, %v117, 0
    %v152 = vsel %vm144, %v118, 0
    %v155 = vsel %vm144, %v119, 0
    %v158 = vsel %vm144, %v120, 0
    %v161 = vsel %vm144, %v121, 0
    %v164 = vsel %vm144, %v122, 0
    %v167 = vsel %vm144, %v123, 0
    %169 = vmatprep.subr.bf16.mxu0 0
    %170 = vmatpush1.bf16.msra.mxu0 0
    %171 = vmatprep.subr.bf16.mxu0 0
    %172 = vmatpush1.bf16.msra.mxu0 0
    %173 = vmatprep.subr.bf16.mxu0 0
    %174 = vmatpush1.bf16.msra.mxu0 0
    %175 = vmatprep.subr.bf16.mxu0 0
    %176 = vmatpush1.bf16.msra.mxu0 0
    %177 = vmatprep.subr.bf16.mxu0 0
    %178 = vmatpush1.bf16.msra.mxu0 0
    %179 = vmatprep.subr.bf16.mxu0 0
    %180 = vmatpush1.bf16.msra.mxu0 0
    %181 = vmatprep.subr.bf16.mxu0 %v139
    %182 = vmatpush1.bf16.msra.mxu0 %v138
    %183 = vmatprep.subr.bf16.mxu0 %v137
    %184 = vmatpush1.bf16.msra.mxu0 %v136
    %185 = vmatprep.subr.bf16.mxu0 0
    %186 = vmatpush2.bf16.msra.mxu0 0
    %187 = vmatprep.subr.bf16.mxu0 0
    %188 = vmatpush2.bf16.msra.mxu0 0
    %189 = vmatprep.subr.bf16.mxu0 0
    %190 = vmatpush2.bf16.msra.mxu0 0
    %191 = vmatprep.subr.bf16.mxu0 0
    %192 = vmatpush2.bf16.msra.mxu0 0
    %193 = vmatprep.subr.bf16.mxu0 0
    %194 = vmatpush2.bf16.msra.mxu0 0
    %195 = vmatprep.subr.bf16.mxu0 0
    %196 = vmatpush2.bf16.msra.mxu0 0
    %197 = vmatprep.subr.bf16.mxu0 0
    %198 = vmatpush2.bf16.msra.mxu0 0
    %199 = vmatprep.subr.bf16.mxu0 0
    %200 = vmatpush2.bf16.msra.mxu0 0
    %201 = vmatprep.mubr.bf16.mxu0 0
    %202 = vmatmul.mubr.bf16.gmra.mxu0 %v146
    %v203 = vpop.f32.mrf.mxu0
    %v204 = vadd.f32 %v77, %v203
    %v205 = vpop.f32.mrf.mxu0
    %v206 = vadd.f32 %v81, %v205
    %v207 = vpop.f32.mrf.mxu0
    %v208 = vadd.f32 %v77, %v207
    %v209 = vpop.f32.mrf.mxu0
    %v210 = vadd.f32 %v81, %v209
    %211 = vmatprep.mubr.bf16.mxu0 0
    %212 = vmatmul.mubr.bf16.gmra.mxu0 %v149
    %v213 = vpop.f32.mrf.mxu0
    %v214 = vadd.f32 %v77, %v213
    %v215 = vpop.f32.mrf.mxu0
    %v216 = vadd.f32 %v81, %v215
    %v217 = vpop.f32.mrf.mxu0
    %v218 = vadd.f32 %v77, %v217
    %v219 = vpop.f32.mrf.mxu0
    %v220 = vadd.f32 %v81, %v219
    %221 = vmatprep.mubr.bf16.mxu0 0
    %222 = vmatmul.mubr.bf16.gmra.mxu0 %v152
    %v223 = vpop.f32.mrf.mxu0
    %v224 = vadd.f32 %v77, %v223
    %v225 = vpop.f32.mrf.mxu0
    %v226 = vadd.f32 %v81, %v225
    %v227 = vpop.f32.mrf.mxu0
    %v228 = vadd.f32 %v77, %v227
    %v229 = vpop.f32.mrf.mxu0
    %v230 = vadd.f32 %v81, %v229
    %231 = vmatprep.mubr.bf16.mxu0 0
    %232 = vmatmul.mubr.bf16.gmra.mxu0 %v155
    %v233 = vpop.f32.mrf.mxu0
    %v234 = vadd.f32 %v77, %v233
    %v235 = vpop.f32.mrf.mxu0
    %v236 = vadd.f32 %v81, %v235
    %v237 = vpop.f32.mrf.mxu0
    %v238 = vadd.f32 %v77, %v237
    %v239 = vpop.f32.mrf.mxu0
    %v240 = vadd.f32 %v81, %v239
    %241 = vmatprep.mubr.bf16.mxu0 0
    %242 = vmatmul.mubr.bf16.gmra.mxu0 %v158
    %v243 = vpop.f32.mrf.mxu0
    %v244 = vadd.f32 %v77, %v243
    %v245 = vpop.f32.mrf.mxu0
    %v246 = vadd.f32 %v81, %v245
    %v247 = vpop.f32.mrf.mxu0
    %v248 = vadd.f32 %v77, %v247
    %v249 = vpop.f32.mrf.mxu0
    %v250 = vadd.f32 %v81, %v249
    %251 = vmatprep.mubr.bf16.mxu0 0
    %252 = vmatmul.mubr.bf16.gmra.mxu0 %v161
    %v253 = vpop.f32.mrf.mxu0
    %v254 = vadd.f32 %v77, %v253
    %v255 = vpop.f32.mrf.mxu0
    %v256 = vadd.f32 %v81, %v255
    %v257 = vpop.f32.mrf.mxu0
    %v258 = vadd.f32 %v77, %v257
    %v259 = vpop.f32.mrf.mxu0
    %v260 = vadd.f32 %v81, %v259
    %261 = vmatprep.mubr.bf16.mxu0 0
    %262 = vmatmul.mubr.bf16.gmra.mxu0 %v164
    %v263 = vpop.f32.mrf.mxu0
    %v264 = vadd.f32 %v77, %v263
    %v265 = vpop.f32.mrf.mxu0
    %v266 = vadd.f32 %v81, %v265
    %v267 = vpop.f32.mrf.mxu0
    %v268 = vadd.f32 %v77, %v267
    %v269 = vpop.f32.mrf.mxu0
    %v270 = vadd.f32 %v81, %v269
    %271 = vmatprep.mubr.bf16.mxu0 0
    %272 = vmatmul.mubr.bf16.gmra.mxu0 %v167
    %v273 = vpop.f32.mrf.mxu0
    %v274 = vadd.f32 %v77, %v273
    %v275 = vpop.f32.mrf.mxu0
    %v276 = vadd.f32 %v81, %v275
    %v277 = vpop.f32.mrf.mxu0
    %v278 = vadd.f32 %v77, %v277
    %v279 = vpop.f32.mrf.mxu0
    %v280 = vadd.f32 %v81, %v279
    %281 = vdwg.mxu0
    %v282 = vmax.f32 %v204, 0.0
    %v283 = vmax.f32 %v206, 0.0
    %v284 = vmax.f32 %v208, 0.0
    %v285 = vmax.f32 %v210, 0.0
    %v286 = vmax.f32 %v214, 0.0
    %v287 = vmax.f32 %v216, 0.0
    %v288 = vmax.f32 %v218, 0.0
    %v289 = vmax.f32 %v220, 0.0
    %v290 = vmax.f32 %v224, 0.0
    %v291 = vmax.f32 %v226, 0.0
    %v292 = vmax.f32 %v228, 0.0
    %v293 = vmax.f32 %v230, 0.0
    %v294 = vmax.f32 %v234, 0.0
    %v295 = vmax.f32 %v236, 0.0
    %v296 = vmax.f32 %v238, 0.0
    %v297 = vmax.f32 %v240, 0.0
    %v298 = vmax.f32 %v244, 0.0
    %v299 = vmax.f32 %v246, 0.0
    %v300 = vmax.f32 %v248, 0.0
    %v301 = vmax.f32 %v250, 0.0
    %v302 = vmax.f32 %v254, 0.0
    %v303 = vmax.f32 %v256, 0.0
    %v304 = vmax.f32 %v258, 0.0
    %v305 = vmax.f32 %v260, 0.0
    %v306 = vmax.f32 %v264, 0.0
    %v307 = vmax.f32 %v266, 0.0
    %v308 = vmax.f32 %v268, 0.0
    %v309 = vmax.f32 %v270, 0.0
    %v310 = vmax.f32 %v274, 0.0
    %v311 = vmax.f32 %v276, 0.0
    %v312 = vmax.f32 %v278, 0.0
    %v313 = vmax.f32 %v280, 0.0
    %v314 = vpack.c.bf16 %v284, %v282
    %v315 = vpack.c.bf16 %v285, %v283
    %v316 = vpack.c.bf16 %v288, %v286
    %v317 = vpack.c.bf16 %v289, %v287
    %v318 = vpack.c.bf16 %v292, %v290
    %v319 = vpack.c.bf16 %v293, %v291
    %v320 = vpack.c.bf16 %v296, %v294
    %v321 = vpack.c.bf16 %v297, %v295
    %v322 = vpack.c.bf16 %v300, %v298
    %v323 = vpack.c.bf16 %v301, %v299
    %v324 = vpack.c.bf16 %v304, %v302
    %v325 = vpack.c.bf16 %v305, %v303
    %v326 = vpack.c.bf16 %v308, %v306
    %v327 = vpack.c.bf16 %v309, %v307
    %v328 = vpack.c.bf16 %v312, %v310
    %v329 = vpack.c.bf16 %v313, %v311
    %v330 = vld [vmem:[#allocation2] sm:$0xff]
    %v331 = vld [vmem:[#allocation2 + $0x8] sm:$0xff]
    %v332 = vld [vmem:[#allocation2 + $0x10] sm:$0xff]
    %v333 = vld [vmem:[#allocation2 + $0x18] sm:$0xff]
    %v334 = vld [vmem:[#allocation2 + $0x20] sm:$0xff]
    %v335 = vld [vmem:[#allocation2 + $0x28] sm:$0xff]
    %v336 = vld [vmem:[#allocation2 + $0x30] sm:$0xff]
    %v337 = vld [vmem:[#allocation2 + $0x38] sm:$0xff]
    %v338 = vld [vmem:[#allocation2 + $0x40] sm:$0xff]
    %v339 = vld [vmem:[#allocation2 + $0x48] sm:$0xff]
    %v340 = vld [vmem:[#allocation2 + $0x50] sm:$0xff]
    %v341 = vld [vmem:[#allocation2 + $0x58] sm:$0xff]
    %v342 = vld [vmem:[#allocation2 + $0x60] sm:$0xff]
    %v343 = vld [vmem:[#allocation2 + $0x68] sm:$0xff]
    %v344 = vld [vmem:[#allocation2 + $0x70] sm:$0xff]
    %v345 = vld [vmem:[#allocation2 + $0x78] sm:$0xff]
    %v346 = vld [vmem:[#allocation2 + $0x80] sm:$0xff]
    %v347 = vld [vmem:[#allocation2 + $0x88] sm:$0xff]
    %v348 = vld [vmem:[#allocation2 + $0x90] sm:$0xff]
    %v349 = vld [vmem:[#allocation2 + $0x98] sm:$0xff]
    %v350 = vld [vmem:[#allocation2 + $0xa0] sm:$0xff]
    %v351 = vld [vmem:[#allocation2 + $0xa8] sm:$0xff]
    %v352 = vld [vmem:[#allocation2 + $0xb0] sm:$0xff]
    %v353 = vld [vmem:[#allocation2 + $0xb8] sm:$0xff]
    %v354 = vld [vmem:[#allocation2 + $0xc0] sm:$0xff]
    %v355 = vld [vmem:[#allocation2 + $0xc8] sm:$0xff]
    %v356 = vld [vmem:[#allocation2 + $0xd0] sm:$0xff]
    %v357 = vld [vmem:[#allocation2 + $0xd8] sm:$0xff]
    %v358 = vld [vmem:[#allocation2 + $0xe0] sm:$0xff]
    %v359 = vld [vmem:[#allocation2 + $0xe8] sm:$0xff]
    %v360 = vld [vmem:[#allocation2 + $0xf0] sm:$0xff]
    %v361 = vld [vmem:[#allocation2 + $0xf8] sm:$0xff]
    %v363 = vlaneseq
    %v364 = vshrl.u32 %v363, 7
    %v365 = vsub.s32 0, %v364
    %v366 = vrot.slane %v51, %v365
    %v367 = vlaneseq
    %v368 = vshrl.u32 %v367, 7
    %v369 = vsub.s32 1, %v368
    %v370 = vrot.slane %v51, %v369
    %v405 = vunpack.c.l.b16 %v330
    %v406 = vunpack.c.h.b16 %v330
    %v407 = vunpack.c.l.b16 %v331
    %v408 = vunpack.c.h.b16 %v331
    %v409 = vunpack.c.l.b16 %v332
    %v410 = vunpack.c.h.b16 %v332
    %v411 = vunpack.c.l.b16 %v333
    %v412 = vunpack.c.h.b16 %v333
    %v413 = vunpack.c.l.b16 %v334
    %v414 = vunpack.c.h.b16 %v334
    %v415 = vunpack.c.l.b16 %v335
    %v416 = vunpack.c.h.b16 %v335
    %v417 = vunpack.c.l.b16 %v336
    %v418 = vunpack.c.h.b16 %v336
    %v419 = vunpack.c.l.b16 %v337
    %v420 = vunpack.c.h.b16 %v337
    %v421 = vunpack.c.l.b16 %v338
    %v422 = vunpack.c.h.b16 %v338
    %v423 = vunpack.c.l.b16 %v339
    %v424 = vunpack.c.h.b16 %v339
    %v425 = vunpack.c.l.b16 %v340
    %v426 = vunpack.c.h.b16 %v340
    %v427 = vunpack.c.l.b16 %v341
    %v428 = vunpack.c.h.b16 %v341
    %v429 = vunpack.c.l.b16 %v342
    %v430 = vunpack.c.h.b16 %v342
    %v431 = vunpack.c.l.b16 %v343
    %v432 = vunpack.c.h.b16 %v343
    %v433 = vunpack.c.l.b16 %v344
    %v434 = vunpack.c.h.b16 %v344
    %v435 = vunpack.c.l.b16 %v345
    %v436 = vunpack.c.h.b16 %v345
    %v437 = vunpack.c.l.b16 %v346
    %v438 = vunpack.c.h.b16 %v346
    %v439 = vunpack.c.l.b16 %v347
    %v440 = vunpack.c.h.b16 %v347
    %v441 = vunpack.c.l.b16 %v348
    %v442 = vunpack.c.h.b16 %v348
    %v443 = vunpack.c.l.b16 %v349
    %v444 = vunpack.c.h.b16 %v349
    %v445 = vunpack.c.l.b16 %v350
    %v446 = vunpack.c.h.b16 %v350
    %v447 = vunpack.c.l.b16 %v351
    %v448 = vunpack.c.h.b16 %v351
    %v449 = vunpack.c.l.b16 %v352
    %v450 = vunpack.c.h.b16 %v352
    %v451 = vunpack.c.l.b16 %v353
    %v452 = vunpack.c.h.b16 %v353
    %v453 = vunpack.c.l.b16 %v354
    %v454 = vunpack.c.h.b16 %v354
    %v455 = vunpack.c.l.b16 %v355
    %v456 = vunpack.c.h.b16 %v355
    %v457 = vunpack.c.l.b16 %v356
    %v458 = vunpack.c.h.b16 %v356
    %v459 = vunpack.c.l.b16 %v357
    %v460 = vunpack.c.h.b16 %v357
    %v461 = vunpack.c.l.b16 %v358
    %v462 = vunpack.c.h.b16 %v358
    %v463 = vunpack.c.l.b16 %v359
    %v464 = vunpack.c.h.b16 %v359
    %v465 = vunpack.c.l.b16 %v360
    %v466 = vunpack.c.h.b16 %v360
    %v467 = vunpack.c.l.b16 %v361
    %v468 = vunpack.c.h.b16 %v361
    %v469 = vpack.c.b16 %v407, %v405
    %v470 = vpack.c.b16 %v408, %v406
    %v471 = vpack.c.b16 %v411, %v409
    %v472 = vpack.c.b16 %v412, %v410
    %v473 = vpack.c.b16 %v415, %v413
    %v474 = vpack.c.b16 %v416, %v414
    %v475 = vpack.c.b16 %v419, %v417
    %v476 = vpack.c.b16 %v420, %v418
    %v477 = vpack.c.b16 %v423, %v421
    %v478 = vpack.c.b16 %v424, %v422
    %v479 = vpack.c.b16 %v427, %v425
    %v480 = vpack.c.b16 %v428, %v426
    %v481 = vpack.c.b16 %v431, %v429
    %v482 = vpack.c.b16 %v432, %v430
    %v483 = vpack.c.b16 %v435, %v433
    %v484 = vpack.c.b16 %v436, %v434
    %v485 = vpack.c.b16 %v439, %v437
    %v486 = vpack.c.b16 %v440, %v438
    %v487 = vpack.c.b16 %v443, %v441
    %v488 = vpack.c.b16 %v444, %v442
    %v489 = vpack.c.b16 %v447, %v445
    %v490 = vpack.c.b16 %v448, %v446
    %v491 = vpack.c.b16 %v451, %v449
    %v492 = vpack.c.b16 %v452, %v450
    %v493 = vpack.c.b16 %v455, %v453
    %v494 = vpack.c.b16 %v456, %v454
    %v495 = vpack.c.b16 %v459, %v457
    %v496 = vpack.c.b16 %v460, %v458
    %v497 = vpack.c.b16 %v463, %v461
    %v498 = vpack.c.b16 %v464, %v462
    %v499 = vpack.c.b16 %v467, %v465
    %v500 = vpack.c.b16 %v468, %v466
    %533 = vmatprep.subr.bf16.mxu0 %v484
    %534 = vmatpush1.bf16.msra.mxu0 %v483
    %535 = vmatprep.subr.bf16.mxu0 %v482
    %536 = vmatpush1.bf16.msra.mxu0 %v481
    %537 = vmatprep.subr.bf16.mxu0 %v480
    %538 = vmatpush1.bf16.msra.mxu0 %v479
    %539 = vmatprep.subr.bf16.mxu0 %v478
    %540 = vmatpush1.bf16.msra.mxu0 %v477
    %541 = vmatprep.subr.bf16.mxu0 %v476
    %542 = vmatpush1.bf16.msra.mxu0 %v475
    %543 = vmatprep.subr.bf16.mxu0 %v474
    %544 = vmatpush1.bf16.msra.mxu0 %v473
    %545 = vmatprep.subr.bf16.mxu0 %v472
    %546 = vmatpush1.bf16.msra.mxu0 %v471
    %547 = vmatprep.subr.bf16.mxu0 %v470
    %548 = vmatpush1.bf16.msra.mxu0 %v469
    %549 = vmatprep.subr.bf16.mxu0 %v500
    %550 = vmatpush2.bf16.msra.mxu0 %v499
    %551 = vmatprep.subr.bf16.mxu0 %v498
    %552 = vmatpush2.bf16.msra.mxu0 %v497
    %553 = vmatprep.subr.bf16.mxu0 %v496
    %554 = vmatpush2.bf16.msra.mxu0 %v495
    %555 = vmatprep.subr.bf16.mxu0 %v494
    %556 = vmatpush2.bf16.msra.mxu0 %v493
    %557 = vmatprep.subr.bf16.mxu0 %v492
    %558 = vmatpush2.bf16.msra.mxu0 %v491
    %559 = vmatprep.subr.bf16.mxu0 %v490
    %560 = vmatpush2.bf16.msra.mxu0 %v489
    %561 = vmatprep.subr.bf16.mxu0 %v488
    %562 = vmatpush2.bf16.msra.mxu0 %v487
    %563 = vmatprep.subr.bf16.mxu0 %v486
    %564 = vmatpush2.bf16.msra.mxu0 %v485
    %565 = vmatprep.mubr.bf16.mxu0 %v315
    %566 = vmatmul.mubr.bf16.gmra.mxu0 %v314
    %v567 = vpop.f32.mrf.mxu0
    %v568 = vadd.f32 %v366, %v567
    %v569 = vpop.f32.mrf.mxu0
    %v570 = vadd.f32 %v370, %v569
    %v571 = vpop.f32.mrf.mxu0
    %v572 = vadd.f32 %v366, %v571
    %v573 = vpop.f32.mrf.mxu0
    %v574 = vadd.f32 %v370, %v573
    %575 = vmatprep.mubr.bf16.mxu0 %v317
    %576 = vmatmul.mubr.bf16.gmra.mxu0 %v316
    %v577 = vpop.f32.mrf.mxu0
    %v578 = vadd.f32 %v366, %v577
    %v579 = vpop.f32.mrf.mxu0
    %v580 = vadd.f32 %v370, %v579
    %v581 = vpop.f32.mrf.mxu0
    %v582 = vadd.f32 %v366, %v581
    %v583 = vpop.f32.mrf.mxu0
    %v584 = vadd.f32 %v370, %v583
    %585 = vmatprep.mubr.bf16.mxu0 %v319
    %586 = vmatmul.mubr.bf16.gmra.mxu0 %v318
    %v587 = vpop.f32.mrf.mxu0
    %v588 = vadd.f32 %v366, %v587
    %v589 = vpop.f32.mrf.mxu0
    %v590 = vadd.f32 %v370, %v589
    %v591 = vpop.f32.mrf.mxu0
    %v592 = vadd.f32 %v366, %v591
    %v593 = vpop.f32.mrf.mxu0
    %v594 = vadd.f32 %v370, %v593
    %595 = vmatprep.mubr.bf16.mxu0 %v321
    %596 = vmatmul.mubr.bf16.gmra.mxu0 %v320
    %v597 = vpop.f32.mrf.mxu0
    %v598 = vadd.f32 %v366, %v597
    %v599 = vpop.f32.mrf.mxu0
    %v600 = vadd.f32 %v370, %v599
    %v601 = vpop.f32.mrf.mxu0
    %v602 = vadd.f32 %v366, %v601
    %v603 = vpop.f32.mrf.mxu0
    %v604 = vadd.f32 %v370, %v603
    %605 = vmatprep.mubr.bf16.mxu0 %v323
    %606 = vmatmul.mubr.bf16.gmra.mxu0 %v322
    %v607 = vpop.f32.mrf.mxu0
    %v608 = vadd.f32 %v366, %v607
    %v609 = vpop.f32.mrf.mxu0
    %v610 = vadd.f32 %v370, %v609
    %v611 = vpop.f32.mrf.mxu0
    %v612 = vadd.f32 %v366, %v611
    %v613 = vpop.f32.mrf.mxu0
    %v614 = vadd.f32 %v370, %v613
    %615 = vmatprep.mubr.bf16.mxu0 %v325
    %616 = vmatmul.mubr.bf16.gmra.mxu0 %v324
    %v617 = vpop.f32.mrf.mxu0
    %v618 = vadd.f32 %v366, %v617
    %v619 = vpop.f32.mrf.mxu0
    %v620 = vadd.f32 %v370, %v619
    %v621 = vpop.f32.mrf.mxu0
    %v622 = vadd.f32 %v366, %v621
    %v623 = vpop.f32.mrf.mxu0
    %v624 = vadd.f32 %v370, %v623
    %625 = vmatprep.mubr.bf16.mxu0 %v327
    %626 = vmatmul.mubr.bf16.gmra.mxu0 %v326
    %v627 = vpop.f32.mrf.mxu0
    %v628 = vadd.f32 %v366, %v627
    %v629 = vpop.f32.mrf.mxu0
    %v630 = vadd.f32 %v370, %v629
    %v631 = vpop.f32.mrf.mxu0
    %v632 = vadd.f32 %v366, %v631
    %v633 = vpop.f32.mrf.mxu0
    %v634 = vadd.f32 %v370, %v633
    %635 = vmatprep.mubr.bf16.mxu0 %v329
    %636 = vmatmul.mubr.bf16.gmra.mxu0 %v328
    %v637 = vpop.f32.mrf.mxu0
    %v638 = vadd.f32 %v366, %v637
    %v639 = vpop.f32.mrf.mxu0
    %v640 = vadd.f32 %v370, %v639
    %v641 = vpop.f32.mrf.mxu0
    %v642 = vadd.f32 %v366, %v641
    %v643 = vpop.f32.mrf.mxu0
    %v644 = vadd.f32 %v370, %v643
    %645 = vdwg.mxu0
    %v646 = vmax.f32 %v568, 0.0
    %v647 = vmax.f32 %v570, 0.0
    %v648 = vmax.f32 %v572, 0.0
    %v649 = vmax.f32 %v574, 0.0
    %v650 = vmax.f32 %v578, 0.0
    %v651 = vmax.f32 %v580, 0.0
    %v652 = vmax.f32 %v582, 0.0
    %v653 = vmax.f32 %v584, 0.0
    %v654 = vmax.f32 %v588, 0.0
    %v655 = vmax.f32 %v590, 0.0
    %v656 = vmax.f32 %v592, 0.0
    %v657 = vmax.f32 %v594, 0.0
    %v658 = vmax.f32 %v598, 0.0
    %v659 = vmax.f32 %v600, 0.0
    %v660 = vmax.f32 %v602, 0.0
    %v661 = vmax.f32 %v604, 0.0
    %v662 = vmax.f32 %v608, 0.0
    %v663 = vmax.f32 %v610, 0.0
    %v664 = vmax.f32 %v612, 0.0
    %v665 = vmax.f32 %v614, 0.0
    %v666 = vmax.f32 %v618, 0.0
    %v667 = vmax.f32 %v620, 0.0
    %v668 = vmax.f32 %v622, 0.0
    %v669 = vmax.f32 %v624, 0.0
    %v670 = vmax.f32 %v628, 0.0
    %v671 = vmax.f32 %v630, 0.0
    %v672 = vmax.f32 %v632, 0.0
    %v673 = vmax.f32 %v634, 0.0
    %v674 = vmax.f32 %v638, 0.0
    %v675 = vmax.f32 %v640, 0.0
    %v676 = vmax.f32 %v642, 0.0
    %v677 = vmax.f32 %v644, 0.0
    %v678 = vpack.c.bf16 %v648, %v646
    %v679 = vpack.c.bf16 %v649, %v647
    %v680 = vpack.c.bf16 %v652, %v650
    %v681 = vpack.c.bf16 %v653, %v651
    %v682 = vpack.c.bf16 %v656, %v654
    %v683 = vpack.c.bf16 %v657, %v655
    %v684 = vpack.c.bf16 %v660, %v658
    %v685 = vpack.c.bf16 %v661, %v659
    %v686 = vpack.c.bf16 %v664, %v662
    %v687 = vpack.c.bf16 %v665, %v663
    %v688 = vpack.c.bf16 %v668, %v666
    %v689 = vpack.c.bf16 %v669, %v667
    %v690 = vpack.c.bf16 %v672, %v670
    %v691 = vpack.c.bf16 %v673, %v671
    %v692 = vpack.c.bf16 %v676, %v674
    %v693 = vpack.c.bf16 %v677, %v675
    %v694 = vld [vmem:[#allocation5] sm:$0xf]
    %v695 = vld [vmem:[#allocation5 + $0x4] sm:$0xf]
    %v696 = vld [vmem:[#allocation5 + $0x8] sm:$0xf]
    %v697 = vld [vmem:[#allocation5 + $0xc] sm:$0xf]
    %v698 = vld [vmem:[#allocation5 + $0x10] sm:$0xf]
    %v699 = vld [vmem:[#allocation5 + $0x14] sm:$0xf]
    %v700 = vld [vmem:[#allocation5 + $0x18] sm:$0xf]
    %v701 = vld [vmem:[#allocation5 + $0x1c] sm:$0xf]
    %v702 = vld [vmem:[#allocation5 + $0x20] sm:$0xf]
    %v703 = vld [vmem:[#allocation5 + $0x24] sm:$0xf]
    %v704 = vld [vmem:[#allocation5 + $0x28] sm:$0xf]
    %v705 = vld [vmem:[#allocation5 + $0x2c] sm:$0xf]
    %v706 = vld [vmem:[#allocation5 + $0x30] sm:$0xf]
    %v707 = vld [vmem:[#allocation5 + $0x34] sm:$0xf]
    %v708 = vld [vmem:[#allocation5 + $0x38] sm:$0xf]
    %v709 = vld [vmem:[#allocation5 + $0x3c] sm:$0xf]
    %v710 = vld [vmem:[#allocation5 + $0x40] sm:$0xf]
    %v711 = vld [vmem:[#allocation5 + $0x44] sm:$0xf]
    %v712 = vld [vmem:[#allocation5 + $0x48] sm:$0xf]
    %v713 = vld [vmem:[#allocation5 + $0x4c] sm:$0xf]
    %v714 = vld [vmem:[#allocation5 + $0x50] sm:$0xf]
    %v715 = vld [vmem:[#allocation5 + $0x54] sm:$0xf]
    %v716 = vld [vmem:[#allocation5 + $0x58] sm:$0xf]
    %v717 = vld [vmem:[#allocation5 + $0x5c] sm:$0xf]
    %v718 = vld [vmem:[#allocation5 + $0x60] sm:$0xf]
    %v719 = vld [vmem:[#allocation5 + $0x64] sm:$0xf]
    %v720 = vld [vmem:[#allocation5 + $0x68] sm:$0xf]
    %v721 = vld [vmem:[#allocation5 + $0x6c] sm:$0xf]
    %v722 = vld [vmem:[#allocation5 + $0x70] sm:$0xf]
    %v723 = vld [vmem:[#allocation5 + $0x74] sm:$0xf]
    %v724 = vld [vmem:[#allocation5 + $0x78] sm:$0xf]
    %v725 = vld [vmem:[#allocation5 + $0x7c] sm:$0xf]
    %v727 = vlaneseq
    %v728 = vshrl.u32 %v727, 7
    %v729 = vsub.s32 0, %v728
    %v730 = vrot.slane %v52, %v729
    %v764 = vunpack.c.l.b16 %v694
    %v765 = vunpack.c.l.b16 %v695
    %v766 = vunpack.c.l.b16 %v696
    %v767 = vunpack.c.l.b16 %v697
    %v768 = vunpack.c.l.b16 %v698
    %v769 = vunpack.c.l.b16 %v699
    %v770 = vunpack.c.l.b16 %v700
    %v771 = vunpack.c.l.b16 %v701
    %v772 = vunpack.c.l.b16 %v702
    %v773 = vunpack.c.l.b16 %v703
    %v774 = vunpack.c.l.b16 %v704
    %v775 = vunpack.c.l.b16 %v705
    %v776 = vunpack.c.l.b16 %v706
    %v777 = vunpack.c.l.b16 %v707
    %v778 = vunpack.c.l.b16 %v708
    %v779 = vunpack.c.l.b16 %v709
    %v780 = vunpack.c.l.b16 %v710
    %v781 = vunpack.c.l.b16 %v711
    %v782 = vunpack.c.l.b16 %v712
    %v783 = vunpack.c.l.b16 %v713
    %v784 = vunpack.c.l.b16 %v714
    %v785 = vunpack.c.l.b16 %v715
    %v786 = vunpack.c.l.b16 %v716
    %v787 = vunpack.c.l.b16 %v717
    %v788 = vunpack.c.l.b16 %v718
    %v789 = vunpack.c.l.b16 %v719
    %v790 = vunpack.c.l.b16 %v720
    %v791 = vunpack.c.l.b16 %v721
    %v792 = vunpack.c.l.b16 %v722
    %v793 = vunpack.c.l.b16 %v723
    %v794 = vunpack.c.l.b16 %v724
    %v795 = vunpack.c.l.b16 %v725
    %v796 = vpack.c.b16 %v765, %v764
    %v797 = vpack.c.b16 %v767, %v766
    %v798 = vpack.c.b16 %v769, %v768
    %v799 = vpack.c.b16 %v771, %v770
    %v800 = vpack.c.b16 %v773, %v772
    %v801 = vpack.c.b16 %v775, %v774
    %v802 = vpack.c.b16 %v777, %v776
    %v803 = vpack.c.b16 %v779, %v778
    %v804 = vpack.c.b16 %v781, %v780
    %v805 = vpack.c.b16 %v783, %v782
    %v806 = vpack.c.b16 %v785, %v784
    %v807 = vpack.c.b16 %v787, %v786
    %v808 = vpack.c.b16 %v789, %v788
    %v809 = vpack.c.b16 %v791, %v790
    %v810 = vpack.c.b16 %v793, %v792
    %v811 = vpack.c.b16 %v795, %v794
    %828 = vmatprep.subr.bf16.mxu0 0
    %829 = vmatpush1.bf16.msra.mxu0 %v803
    %830 = vmatprep.subr.bf16.mxu0 0
    %831 = vmatpush1.bf16.msra.mxu0 %v802
    %832 = vmatprep.subr.bf16.mxu0 0
    %833 = vmatpush1.bf16.msra.mxu0 %v801
    %834 = vmatprep.subr.bf16.mxu0 0
    %835 = vmatpush1.bf16.msra.mxu0 %v800
    %836 = vmatprep.subr.bf16.mxu0 0
    %837 = vmatpush1.bf16.msra.mxu0 %v799
    %838 = vmatprep.subr.bf16.mxu0 0
    %839 = vmatpush1.bf16.msra.mxu0 %v798
    %840 = vmatprep.subr.bf16.mxu0 0
    %841 = vmatpush1.bf16.msra.mxu0 %v797
    %842 = vmatprep.subr.bf16.mxu0 0
    %843 = vmatpush1.bf16.msra.mxu0 %v796
    %844 = vmatprep.subr.bf16.mxu0 0
    %845 = vmatpush2.bf16.msra.mxu0 %v811
    %846 = vmatprep.subr.bf16.mxu0 0
    %847 = vmatpush2.bf16.msra.mxu0 %v810
    %848 = vmatprep.subr.bf16.mxu0 0
    %849 = vmatpush2.bf16.msra.mxu0 %v809
    %850 = vmatprep.subr.bf16.mxu0 0
    %851 = vmatpush2.bf16.msra.mxu0 %v808
    %852 = vmatprep.subr.bf16.mxu0 0
    %853 = vmatpush2.bf16.msra.mxu0 %v807
    %854 = vmatprep.subr.bf16.mxu0 0
    %855 = vmatpush2.bf16.msra.mxu0 %v806
    %856 = vmatprep.subr.bf16.mxu0 0
    %857 = vmatpush2.bf16.msra.mxu0 %v805
    %858 = vmatprep.subr.bf16.mxu0 0
    %859 = vmatpush2.bf16.msra.mxu0 %v804
    %860 = vmatprep.mubr.bf16.mxu0 %v679
    %861 = vmatmul.mubr.bf16.gmra.mxu0 %v678
    %v862 = vpop.f32.mrf.mxu0
    %v863 = vadd.f32 %v730, %v862
    %v864 = vpop.f32.mrf.mxu0
    %v865 = vpop.f32.mrf.mxu0
    %v866 = vadd.f32 %v730, %v865
    %v867 = vpop.f32.mrf.mxu0
    %868 = vmatprep.mubr.bf16.mxu0 %v681
    %869 = vmatmul.mubr.bf16.gmra.mxu0 %v680
    %v870 = vpop.f32.mrf.mxu0
    %v871 = vadd.f32 %v730, %v870
    %v872 = vpop.f32.mrf.mxu0
    %v873 = vpop.f32.mrf.mxu0
    %v874 = vadd.f32 %v730, %v873
    %v875 = vpop.f32.mrf.mxu0
    %876 = vmatprep.mubr.bf16.mxu0 %v683
    %877 = vmatmul.mubr.bf16.gmra.mxu0 %v682
    %v878 = vpop.f32.mrf.mxu0
    %v879 = vadd.f32 %v730, %v878
    %v880 = vpop.f32.mrf.mxu0
    %v881 = vpop.f32.mrf.mxu0
    %v882 = vadd.f32 %v730, %v881
    %v883 = vpop.f32.mrf.mxu0
    %884 = vmatprep.mubr.bf16.mxu0 %v685
    %885 = vmatmul.mubr.bf16.gmra.mxu0 %v684
    %v886 = vpop.f32.mrf.mxu0
    %v887 = vadd.f32 %v730, %v886
    %v888 = vpop.f32.mrf.mxu0
    %v889 = vpop.f32.mrf.mxu0
    %v890 = vadd.f32 %v730, %v889
    %v891 = vpop.f32.mrf.mxu0
    %892 = vmatprep.mubr.bf16.mxu0 %v687
    %893 = vmatmul.mubr.bf16.gmra.mxu0 %v686
    %v894 = vpop.f32.mrf.mxu0
    %v895 = vadd.f32 %v730, %v894
    %v896 = vpop.f32.mrf.mxu0
    %v897 = vpop.f32.mrf.mxu0
    %v898 = vadd.f32 %v730, %v897
    %v899 = vpop.f32.mrf.mxu0
    %900 = vmatprep.mubr.bf16.mxu0 %v689
    %901 = vmatmul.mubr.bf16.gmra.mxu0 %v688
    %v902 = vpop.f32.mrf.mxu0
    %v903 = vadd.f32 %v730, %v902
    %v904 = vpop.f32.mrf.mxu0
    %v905 = vpop.f32.mrf.mxu0
    %v906 = vadd.f32 %v730, %v905
    %v907 = vpop.f32.mrf.mxu0
    %908 = vmatprep.mubr.bf16.mxu0 %v691
    %909 = vmatmul.mubr.bf16.gmra.mxu0 %v690
    %v910 = vpop.f32.mrf.mxu0
    %v911 = vadd.f32 %v730, %v910
    %v912 = vpop.f32.mrf.mxu0
    %v913 = vpop.f32.mrf.mxu0
    %v914 = vadd.f32 %v730, %v913
    %v915 = vpop.f32.mrf.mxu0
    %916 = vmatprep.mubr.bf16.mxu0 %v693
    %917 = vmatmul.mubr.bf16.gmra.mxu0 %v692
    %v918 = vpop.f32.mrf.mxu0
    %v919 = vadd.f32 %v730, %v918
    %v920 = vpop.f32.mrf.mxu0
    %v921 = vpop.f32.mrf.mxu0
    %v922 = vadd.f32 %v730, %v921
    %v923 = vpop.f32.mrf.mxu0
    %924 = vdwg.mxu0
    %925 = vmax.xlane.f32.xlu0 %v863
    %v926 = vpop.xlane.xlu0 %925
    %927 = vmax.xlane.f32.xlu0 %v866
    %v928 = vpop.xlane.xlu0 %927
    %929 = vmax.xlane.f32.xlu0 %v871
    %v930 = vpop.xlane.xlu0 %929
    %931 = vmax.xlane.f32.xlu0 %v874
    %v932 = vpop.xlane.xlu0 %931
    %933 = vmax.xlane.f32.xlu0 %v879
    %v934 = vpop.xlane.xlu0 %933
    %935 = vmax.xlane.f32.xlu0 %v882
    %v936 = vpop.xlane.xlu0 %935
    %937 = vmax.xlane.f32.xlu0 %v887
    %v938 = vpop.xlane.xlu0 %937
    %939 = vmax.xlane.f32.xlu0 %v890
    %v940 = vpop.xlane.xlu0 %939
    %941 = vmax.xlane.f32.xlu0 %v895
    %v942 = vpop.xlane.xlu0 %941
    %943 = vmax.xlane.f32.xlu0 %v898
    %v944 = vpop.xlane.xlu0 %943
    %945 = vmax.xlane.f32.xlu0 %v903
    %v946 = vpop.xlane.xlu0 %945
    %947 = vmax.xlane.f32.xlu0 %v906
    %v948 = vpop.xlane.xlu0 %947
    %949 = vmax.xlane.f32.xlu0 %v911
    %v950 = vpop.xlane.xlu0 %949
    %951 = vmax.xlane.f32.xlu0 %v914
    %v952 = vpop.xlane.xlu0 %951
    %953 = vmax.xlane.f32.xlu0 %v919
    %v954 = vpop.xlane.xlu0 %953
    %955 = vmax.xlane.f32.xlu0 %v922
    %v956 = vpop.xlane.xlu0 %955
    %v957 = vsub.f32 %v863, %v926
    %v958 = vsub.f32 %v866, %v928
    %v959 = vsub.f32 %v871, %v930
    %v960 = vsub.f32 %v874, %v932
    %v961 = vsub.f32 %v879, %v934
    %v962 = vsub.f32 %v882, %v936
    %v963 = vsub.f32 %v887, %v938
    %v964 = vsub.f32 %v890, %v940
    %v965 = vsub.f32 %v895, %v942
    %v966 = vsub.f32 %v898, %v944
    %v967 = vsub.f32 %v903, %v946
    %v968 = vsub.f32 %v906, %v948
    %v969 = vsub.f32 %v911, %v950
    %v970 = vsub.f32 %v914, %v952
    %v971 = vsub.f32 %v919, %v954
    %v972 = vsub.f32 %v922, %v956
    %v973 = vmul.f32 %v957, 1.442695
    %v974 = vpow.pop %v973
    %v975 = vmul.f32 %v958, 1.442695
    %v976 = vpow.pop %v975
    %v977 = vmul.f32 %v959, 1.442695
    %v978 = vpow.pop %v977
    %v979 = vmul.f32 %v960, 1.442695
    %v980 = vpow.pop %v979
    %v981 = vmul.f32 %v961, 1.442695
    %v982 = vpow.pop %v981
    %v983 = vmul.f32 %v962, 1.442695
    %v984 = vpow.pop %v983
    %v985 = vmul.f32 %v963, 1.442695
    %v986 = vpow.pop %v985
    %v987 = vmul.f32 %v964, 1.442695
    %v988 = vpow.pop %v987
    %v989 = vmul.f32 %v965, 1.442695
    %v990 = vpow.pop %v989
    %v991 = vmul.f32 %v966, 1.442695
    %v992 = vpow.pop %v991
    %v993 = vmul.f32 %v967, 1.442695
    %v994 = vpow.pop %v993
    %v995 = vmul.f32 %v968, 1.442695
    %v996 = vpow.pop %v995
    %v997 = vmul.f32 %v969, 1.442695
    %v998 = vpow.pop %v997
    %v999 = vmul.f32 %v970, 1.442695
    %v1000 = vpow.pop %v999
    %v1001 = vmul.f32 %v971, 1.442695
    %v1002 = vpow.pop %v1001
    %v1003 = vmul.f32 %v972, 1.442695
    %v1004 = vpow.pop %v1003
    %1005 = vadd.xlane.f32.xlu0 %v974
    %v1006 = vpop.xlane.xlu0 %1005
    %1007 = vadd.xlane.f32.xlu0 %v976
    %v1008 = vpop.xlane.xlu0 %1007
    %1009 = vadd.xlane.f32.xlu0 %v978
    %v1010 = vpop.xlane.xlu0 %1009
    %1011 = vadd.xlane.f32.xlu0 %v980
    %v1012 = vpop.xlane.xlu0 %1011
    %1013 = vadd.xlane.f32.xlu0 %v982
    %v1014 = vpop.xlane.xlu0 %1013
    %1015 = vadd.xlane.f32.xlu0 %v984
    %v1016 = vpop.xlane.xlu0 %1015
    %1017 = vadd.xlane.f32.xlu0 %v986
    %v1018 = vpop.xlane.xlu0 %1017
    %1019 = vadd.xlane.f32.xlu0 %v988
    %v1020 = vpop.xlane.xlu0 %1019
    %1021 = vadd.xlane.f32.xlu0 %v990
    %v1022 = vpop.xlane.xlu0 %1021
    %1023 = vadd.xlane.f32.xlu0 %v992
    %v1024 = vpop.xlane.xlu0 %1023
    %1025 = vadd.xlane.f32.xlu0 %v994
    %v1026 = vpop.xlane.xlu0 %1025
    %1027 = vadd.xlane.f32.xlu0 %v996
    %v1028 = vpop.xlane.xlu0 %1027
    %1029 = vadd.xlane.f32.xlu0 %v998
    %v1030 = vpop.xlane.xlu0 %1029
    %1031 = vadd.xlane.f32.xlu0 %v1000
    %v1032 = vpop.xlane.xlu0 %1031
    %1033 = vadd.xlane.f32.xlu0 %v1002
    %v1034 = vpop.xlane.xlu0 %1033
    %1035 = vadd.xlane.f32.xlu0 %v1004
    %v1036 = vpop.xlane.xlu0 %1035
    %v1037 = vrcp.pop %v1006
    %v1038 = vrcp.pop %v1008
    %v1039 = vrcp.pop %v1010
    %v1040 = vrcp.pop %v1012
    %v1041 = vrcp.pop %v1014
    %v1042 = vrcp.pop %v1016
    %v1043 = vrcp.pop %v1018
    %v1044 = vrcp.pop %v1020
    %v1045 = vrcp.pop %v1022
    %v1046 = vrcp.pop %v1024
    %v1047 = vrcp.pop %v1026
    %v1048 = vrcp.pop %v1028
    %v1049 = vrcp.pop %v1030
    %v1050 = vrcp.pop %v1032
    %v1051 = vrcp.pop %v1034
    %v1052 = vrcp.pop %v1036
    %v1053 = vmul.f32 %v974, %v1037
    %v1054 = vmul.f32 %v976, %v1038
    %v1055 = vmul.f32 %v978, %v1039
    %v1056 = vmul.f32 %v980, %v1040
    %v1057 = vmul.f32 %v982, %v1041
    %v1058 = vmul.f32 %v984, %v1042
    %v1059 = vmul.f32 %v986, %v1043
    %v1060 = vmul.f32 %v988, %v1044
    %v1061 = vmul.f32 %v990, %v1045
    %v1062 = vmul.f32 %v992, %v1046
    %v1063 = vmul.f32 %v994, %v1047
    %v1064 = vmul.f32 %v996, %v1048
    %v1065 = vmul.f32 %v998, %v1049
    %v1066 = vmul.f32 %v1000, %v1050
    %v1067 = vmul.f32 %v1002, %v1051
    %v1068 = vmul.f32 %v1004, %v1052
    %1069 = vst [vmem:[#allocation7] sm:$0xff] %v1053
    %1070 = vst [vmem:[#allocation7 + $0x8] sm:$0xff] %v1054
    %1071 = vst [vmem:[#allocation7 + $0x10] sm:$0xff] %v1055
    %1072 = vst [vmem:[#allocation7 + $0x18] sm:$0xff] %v1056
    %1073 = vst [vmem:[#allocation7 + $0x20] sm:$0xff] %v1057
    %1074 = vst [vmem:[#allocation7 + $0x28] sm:$0xff] %v1058
    %1075 = vst [vmem:[#allocation7 + $0x30] sm:$0xff] %v1059
    %1076 = vst [vmem:[#allocation7 + $0x38] sm:$0xff] %v1060
    %1077 = vst [vmem:[#allocation7 + $0x40] sm:$0xff] %v1061
    %1078 = vst [vmem:[#allocation7 + $0x48] sm:$0xff] %v1062
    %1079 = vst [vmem:[#allocation7 + $0x50] sm:$0xff] %v1063
    %1080 = vst [vmem:[#allocation7 + $0x58] sm:$0xff] %v1064
    %1081 = vst [vmem:[#allocation7 + $0x60] sm:$0xff] %v1065
    %1082 = vst [vmem:[#allocation7 + $0x68] sm:$0xff] %v1066
    %1083 = vst [vmem:[#allocation7 + $0x70] sm:$0xff] %v1067
    %1084 = vst [vmem:[#allocation7 + $0x78] sm:$0xff] %v1068
    // Predicated region
    $region30: #{tpu_custom_call.1} parent=1 // pred_check
      _
    $region31: #{tpu_custom_call.1} parent=1 // pred_check_branch
      %1086 = sbr.rel (0) target = $region33
    $region32: #{tpu_custom_call.1} parent=1 // pred_region
      %s1088 = ssub.s32 2048, 2048
      %1089 = vsyncadd [#allocation4], %s1088
      %s1090 = sshll.u32 [#allocation7], 4
      %s1091 = int_to_ptr.vmem [resolvable:$true] %s1090
      %1096 = dma.vmem_to_hbm [thread:$0]  %s1091, 2048, %s5, [#allocation4], 128, 128, 8
    $region33: #{tpu_custom_call.1} parent=1 // pred_fallthru
      _
    // Predicated region
    $region34: #{tpu_custom_call.1} parent=1 // pred_check
      _
    $region35: #{tpu_custom_call.1} parent=1 // pred_check_branch
      %1098 = sbr.rel (0) target = $region37
    $region36: #{tpu_custom_call.1} parent=1 // pred_region
      %1099 = dma.done [#allocation4], 2048
    $region37: #{tpu_custom_call.1} parent=1 // pred_fallthru
      _
    %1100 = vsyncpa [#allocation3], 1
    %1101 = vsyncpa [#allocation6], 1
    %1102 = vsyncpa [#allocation4], 1

</llo_original>
